<compile_context>
chip_gen: v7x
topology: tpu7x:2x2x1
jax: 0.10.0
libtpu: 0.0.40
codegen_flags: <defaults>
</compile_context>

<pallas_src>
import functools

import jax
import jax.numpy as jnp
from jax import lax
from jax.experimental import pallas as pl
from jax.experimental.pallas import tpu as pltpu


_MAX_BLOCK_BYTES = 4 * 1024 * 1024       # target per-grid-step working set


def _pad8(n):
    return ((n + 7) // 8) * 8


def _vmem_limit_bytes():
    # 3/4 of physical VMEM, capped at 96 MiB (v5e/v6e: 96 MiB, v7x: 48 MiB).
    cap = 64 * 1024 * 1024
    try:
        cap = int(pltpu.get_tpu_info().vmem_capacity_bytes)
    except Exception:
        pass
    return int(max(32 * 1024 * 1024, min(cap * 3 // 4, 96 * 1024 * 1024)))


# ------------------------------------------------------------ tile choosers -

def _choose_s_tile(S, Cin, Cout, itemsize=4):
    """Largest multiple-of-128 divisor of S whose per-step working set fits.

    Bytes/lane ~ itemsize * (3*pad8(Cin) + 4*pad8(Cout)):
      2x double-buffered x block + masked x copy (pad8(Cin) sublanes each)
      + ~4 Cout-sized f32/argmax temporaries (logits, iota, where, select).
    """
    if S % 128 != 0:
        return S                          # block == full array dim is allowed
    per_lane = itemsize * (3 * _pad8(Cin) + 4 * _pad8(Cout))
    cap = min(S, max(128, _MAX_BLOCK_BYTES // per_lane))
    t = (cap // 128) * 128
    while t > 128:
        if S % t == 0:
            return t
        t -= 128
    return 128


def _choose_r_tile(H, W, Cin, ymin, ymax, itemsize=4):
    """Rows per tile for the rect path.

    Must divide H and give lane-aligned blocks; among those within the byte
    budget, pick the one that fetches the fewest rows for [ymin, ymax)
    (tie-break: larger tile => fewer grid steps)."""
    cands = []
    for rt in range(1, H + 1):
        if H % rt != 0 or (rt * W) % 128 != 0:
            continue
        if 2 * _pad8(Cin) * rt * W * itemsize > _MAX_BLOCK_BYTES:
            continue
        cands.append(rt)
    if not cands:
        return H                          # whole image = full dims fallback

    def fetched_rows(rt):
        return ((ymax - 1) // rt - ymin // rt + 1) * rt

    return min(cands, key=lambda rt: (fetched_rows(rt), -rt))


# ---------------------------------------------------------------- kernels ---

def class_filter_kernel(mask_ref, x_ref, w_ref, b_ref, o_ref,
                        xacc_ref, cnt_ref):
    # ClassFilterLayer: per-pixel argmax over channels; sum of logits over the
    # pixels whose argmax == target.  Conv is linear, so we only need logits
    # for the argmax; the accumulated quantity is the masked pixel-sum of x
    # (Cin,1) plus a pixel count — one (Cout,Cin)x(Cin,1) matmul at the end.
    s_idx = pl.program_id(2)

    @pl.when(s_idx == 0)
    def _():
        xacc_ref[...] = jnp.zeros_like(xacc_ref)
        cnt_ref[...] = jnp.zeros_like(cnt_ref)

    x = x_ref[0]                                              # (Cin, St)
    logits = jnp.dot(w_ref[...], x,
                     preferred_element_type=jnp.float32) + b_ref[...]
    c, s = logits.shape
    mx = jnp.max(logits, axis=0, keepdims=True)               # (1, St)
    ch = lax.broadcasted_iota(jnp.int32, (c, s), 0)
    # lowest channel index achieving the max -> torch.argmax tie-break
    idx = jnp.min(jnp.where(logits == mx, ch, c), axis=0, keepdims=True)
    sel = (idx == mask_ref[0]).astype(jnp.float32)            # (1, St)
    # lane (S) reduction on the MXU over Cin rows only: (Cin, St) @ (St, 1)
    xacc_ref[...] += jnp.dot(x * sel, jnp.ones((s, 1), jnp.float32),
                             preferred_element_type=jnp.float32)
    cnt_ref[...] += jnp.sum(sel, axis=1, keepdims=True)       # (1, 1)

    @pl.when(s_idx == pl.num_programs(2) - 1)
    def _():
        out = (jnp.dot(w_ref[...], xacc_ref[...],
                       preferred_element_type=jnp.float32)
               + b_ref[...] * cnt_ref[...])
        o_ref[0, 0] = out.astype(o_ref.dtype)


def pixel_filter_kernel(x_ref, w_ref, b_ref, o_ref, *, lane, s_tile):
    # PixelFilterLayer: logits[:, :, y, x].  Only the single 128-lane spatial
    # tile containing (y, x) is DMA'd (static block index); lane is static.
    x = x_ref[0]                                              # (Cin, s_tile)
    pos = lax.broadcasted_iota(jnp.int32, (1, s_tile), 1)
    sel = (pos == lane).astype(jnp.float32)                   # one-hot (1, St)
    x_col = jnp.dot(x * sel, jnp.ones((s_tile, 1), jnp.float32),
                    preferred_element_type=jnp.float32)       # (Cin, 1)
    out = jnp.dot(w_ref[...], x_col,
                  preferred_element_type=jnp.float32) + b_ref[...]
    o_ref[0] = out.astype(o_ref.dtype)


def rect_filter_kernel(x_ref, w_ref, b_ref, o_ref, xacc_ref, *,
                       width, r_tile, blk0, ymin, ymax, xmin, xmax):
    # RectFilterLayer: sum over logits[:, :, ymin:ymax, xmin:xmax].
    # The grid statically covers only row tiles intersecting the rect
    # (blk0 offset); conv linearity => accumulate the masked pixel-sum of x,
    # single matmul + bias*count at the last step.  Rect is pre-clamped.
    r = pl.program_id(1)

    @pl.when(r == 0)
    def _():
        xacc_ref[...] = jnp.zeros_like(xacc_ref)

    x = x_ref[0]                                              # (Cin, r_tile*W)
    s = x.shape[1]
    row0 = (r + blk0) * r_tile                # first image row of this block
    pos = lax.broadcasted_iota(jnp.int32, (1, s), 1)
    gpos = row0 * width + pos                 # global flat position
    col = pos % width
    sel = ((gpos >= ymin * width) & (gpos < ymax * width) &
           (col >= xmin) & (col < xmax)).astype(jnp.float32)
    xacc_ref[...] += jnp.dot(x * sel, jnp.ones((s, 1), jnp.float32),
                             preferred_element_type=jnp.float32)

    @pl.when(r == pl.num_programs(1) - 1)
    def _():
        count = float((ymax - ymin) * (xmax - xmin))
        out = (jnp.dot(w_ref[...], xacc_ref[...],
                       preferred_element_type=jnp.float32)
               + b_ref[...] * count)
        o_ref[0] = out.astype(o_ref.dtype)


# --------------------------------------------------------------- wrappers ---

def _class_forward(x, target, weight, bias2d, s_tile):
    B, Cin, S = x.shape
    Cout = weight.shape[0]
    if s_tile is None:
        s_tile = _choose_s_tile(S, Cin, Cout)
    assert S % s_tile == 0 and (s_tile % 128 == 0 or s_tile == S)
    n_s = S // s_tile
    # Megacore: if B is odd (e.g. B=1), split the spatial axis into two
    # parallel halves so both TensorCores are busy on v7x.
    P = 2 if (B % 2 == 1 and n_s % 2 == 0) else 1
    n_si = n_s // P
    mask_params = jnp.asarray([int(target)], dtype=jnp.int32)

    out = pl.pallas_call(
        class_filter_kernel,
        out_shape=jax.ShapeDtypeStruct((B, P, Cout, 1), jnp.float32),
        grid_spec=pltpu.PrefetchScalarGridSpec(
            num_scalar_prefetch=1,
            grid=(B, P, n_si),
            in_specs=[
                pl.BlockSpec((1, Cin, s_tile),
                             lambda b, p, s, mp: (b, 0, p * n_si + s)),
                pl.BlockSpec((Cout, Cin), lambda b, p, s, mp: (0, 0)),
                pl.BlockSpec((Cout, 1), lambda b, p, s, mp: (0, 0)),
            ],
            out_specs=pl.BlockSpec((1, 1, Cout, 1),
                                   lambda b, p, s, mp: (b, p, 0, 0)),
            scratch_shapes=[pltpu.VMEM((Cin, 1), jnp.float32),
                            pltpu.VMEM((1, 1), jnp.float32)],
        ),
        compiler_params=pltpu.CompilerParams(
            dimension_semantics=("parallel", "parallel", "arbitrary"),
            vmem_limit_bytes=_vmem_limit_bytes()),
    )(mask_params, x, weight, bias2d)
    return jnp.sum(out[..., 0], axis=1)                        # (B, Cout)


def _pixel_forward(x, yx, weight, bias2d, W):
    B, Cin, S = x.shape
    Cout = weight.shape[0]
    y, xx = int(yx[0]), int(yx[1])
    s_tile = 128 if S % 128 == 0 else S
    flat = y * W + xx
    blk, lane = flat // s_tile, flat % s_tile                  # static

    kern = functools.partial(pixel_filter_kernel, lane=lane, s_tile=s_tile)
    out = pl.pallas_call(
        kern,
        out_shape=jax.ShapeDtypeStruct((B, Cout, 1), jnp.float32),
        grid_spec=pltpu.PrefetchScalarGridSpec(
            num_scalar_prefetch=0,
            grid=(B,),
            in_specs=[
                pl.BlockSpec((1, Cin, s_tile), lambda b: (b, 0, blk)),
                pl.BlockSpec((Cout, Cin), lambda b: (0, 0)),
                pl.BlockSpec((Cout, 1), lambda b: (0, 0)),
            ],
            out_specs=pl.BlockSpec((1, Cout, 1), lambda b: (b, 0, 0)),
        ),
        compiler_params=pltpu.CompilerParams(
            dimension_semantics=("parallel",),
            vmem_limit_bytes=_vmem_limit_bytes()),
    )(x, weight, bias2d)
    return out[:, :, 0]


def _rect_forward(x, rect, weight, bias2d, H, W, r_tile):
    B, Cin, S = x.shape
    Cout = weight.shape[0]
    ymin, ymax, xmin, xmax = (int(v) for v in rect)
    # Clamp to the image so the in-kernel mask and bias*count always agree.
    # TODO(synk): torch negative-index slicing semantics are not reproduced.
    ymin_c, ymax_c = max(ymin, 0), min(ymax, H)
    xmin_c, xmax_c = max(xmin, 0), min(xmax, W)
    if ymax_c <= ymin_c or xmax_c <= xmin_c:
        return jnp.zeros((B, Cout), jnp.float32)

    if r_tile is None:
        r_tile = _choose_r_tile(H, W, Cin, ymin_c, ymax_c)
    assert H % r_tile == 0 and ((r_tile * W) % 128 == 0 or r_tile * W == S)
    lanes = r_tile * W
    blk0 = ymin_c // r_tile                    # first row block of the rect
    n_rblk = (ymax_c - 1) // r_tile - blk0 + 1  # only intersecting row tiles

    kern = functools.partial(rect_filter_kernel, width=W, r_tile=r_tile,
                             blk0=blk0, ymin=ymin_c, ymax=ymax_c,
                             xmin=xmin_c, xmax=xmax_c)
    out = pl.pallas_call(
        kern,
        out_shape=jax.ShapeDtypeStruct((B, Cout, 1), jnp.float32),
        grid_spec=pltpu.PrefetchScalarGridSpec(
            num_scalar_prefetch=0,
            grid=(B, n_rblk),
            in_specs=[
                pl.BlockSpec((1, Cin, lanes), lambda b, r: (b, 0, r + blk0)),
                pl.BlockSpec((Cout, Cin), lambda b, r: (0, 0)),
                pl.BlockSpec((Cout, 1), lambda b, r: (0, 0)),
            ],
            out_specs=pl.BlockSpec((1, Cout, 1), lambda b, r: (b, 0, 0)),
            scratch_shapes=[pltpu.VMEM((Cin, 1), jnp.float32)],
        ),
        compiler_params=pltpu.CompilerParams(
            dimension_semantics=("parallel", "arbitrary"),
            vmem_limit_bytes=_vmem_limit_bytes()),
    )(x, weight, bias2d)
    return out[:, :, 0]


def masked_segmentation_forward(x_nchw, mask, weight, bias, *,
                                s_tile=None, r_tile=None):
    """Pallas implementation of MaskedSegmentationModel.forward.

    x_nchw : (B, Cin, H, W) float32
    mask   : int (class filter), (y, x) tuple, or (ymin, ymax, xmin, xmax)
    weight : (Cout, Cin) float32   (synthetic 1x1-conv segmentation model)
    bias   : (Cout,)     float32
    returns: (B, Cout) float32
    """
    B, Cin, H, W = x_nchw.shape
    Cout = weight.shape[0]
    x = x_nchw.reshape(B, Cin, H * W)            # spatial -> lane axis
    bias2d = bias.reshape(Cout, 1)

    # Python-level dispatch, mirroring the hasattr/len checks in PyTorch.
    if hasattr(mask, "__len__"):
        if len(mask) == 2:
            return _pixel_forward(x, mask, weight, bias2d, W)
        if len(mask) == 4:
            return _rect_forward(x, mask, weight, bias2d, H, W, r_tile)
        raise ValueError("mask must have length 2 or 4, or be a scalar")
    return _class_forward(x, mask, weight, bias2d, s_tile)


# -------------------------------------------------------- plain-JAX ref -----

def _reference_forward(x_nchw, mask, weight, bias):
    logits = (jnp.einsum("oc,bchw->bohw", weight, x_nchw)
              + bias[None, :, None, None])
    if hasattr(mask, "__len__"):
        if len(mask) == 2:
            y, xx = mask
            return logits[:, :, y, xx]
        ymin, ymax, xmin, xmax = mask
        return jnp.sum(logits[:, :, ymin:ymax, xmin:xmax], axis=(2, 3))
    B, C = logits.shape[:2]
    lf = logits.reshape(B, C, -1)
    idx = jnp.argmax(lf, axis=1)                  # (B, S)
    sel = (idx == mask)[:, None, :]
    return jnp.sum(lf * sel, axis=-1)


# ------------------------------------------------------------------ main ----

if __name__ == "__main__":
    B, Cin, H, W = 2, 4, 16, 16
    Cout = 8

    key = jax.random.PRNGKey(0)
    kx, kw, kb = jax.random.split(key, 3)
    x = jax.random.normal(kx, (B, Cin, H, W), dtype=jnp.float32)
    weight = jax.random.normal(kw, (Cout, Cin), dtype=jnp.float32) * 0.1
    bias = jax.random.normal(kb, (Cout,), dtype=jnp.float32) * 0.1

    # (input, mask, tiling overrides) — overrides force the multi-tile,
    # megacore-split and static-offset paths to be exercised at toy sizes.
    cases = [
        (x, 3, {}),                               # ClassFilter, single tile
        (x, 3, {"s_tile": 128}),                  # ClassFilter, 2-tile accum
        (x[:1], 3, {"s_tile": 128}),              # ClassFilter, B=1 -> P=2 split
        (x, (5, 7), {}),                          # PixelFilter, spatial block 0
        (x, (12, 7), {}),                         # PixelFilter, spatial block 1
        (x, (2, 10, 4, 12), {"r_tile": 8}),       # RectFilter over two row tiles
        (x, (9, 14, 0, 16), {"r_tile": 8}),       # RectFilter, offset single tile
        (x, (3, 13, 2, 15), {}),                  # RectFilter, auto r_tile
        (x, (5, 5, 0, 16), {}),                   # RectFilter, empty rect -> zeros
    ]

    for xin, mask, overrides in cases:
        got = jax.block_until_ready(
            masked_segmentation_forward(xin, mask, weight, bias, **overrides))
        ref = jax.block_until_ready(_reference_forward(xin, mask, weight, bias))
        assert got.shape == ref.shape, (mask, got.shape, ref.shape)
        assert jnp.allclose(got, ref, atol=1e-4, rtol=1e-4), (mask, got, ref)

    print("KERNEL_OK")
</pallas_src>

<mosaic_0001>
module attributes {stable_mosaic.version = 11 : i64} {
  func.func @class_filter_kernel(%arg0: i32, %arg1: i32, %arg2: i32, %arg3: memref<1xi32, #tpu.memory_space<smem>>, %arg4: memref<1x4x256xf32, #tpu.memory_space<vmem>>, %arg5: memref<8x4xf32, #tpu.memory_space<vmem>>, %arg6: memref<8x1xf32, #tpu.memory_space<vmem>>, %arg7: memref<1x1x8x1xf32, #tpu.memory_space<vmem>>, %arg8: memref<4x1xf32, #tpu.memory_space<vmem>>, %arg9: memref<1x1xf32, #tpu.memory_space<vmem>>) attributes {dimension_semantics = [#tpu.dimension_semantics<parallel>, #tpu.dimension_semantics<parallel>, #tpu.dimension_semantics<arbitrary>], iteration_bounds = array<i64: 2, 1, 1>, scalar_prefetch = 1 : i64, scratch_operands = 2 : i64, tpu.core_type = #tpu.core_type<tc>, window_params = [{transform_indices = @transform_0, window_bounds = array<i64: 1, 4, 256>}, {pipeline_mode = #tpu.pipeline_mode<synchronous>, transform_indices = @transform_1, window_bounds = array<i64: 8, 4>}, {pipeline_mode = #tpu.pipeline_mode<synchronous>, transform_indices = @transform_2, window_bounds = array<i64: 8, 1>}, {transform_indices = @transform_3, window_bounds = array<i64: 1, 1, 8, 1>}]} {
    %c0_i32 = arith.constant 0 : i32
    %0 = arith.cmpi eq, %arg2, %c0_i32 : i32
    %1 = arith.extui %0 : i1 to i32
    %c0_i32_0 = arith.constant 0 : i32
    %2 = arith.cmpi ne, %1, %c0_i32_0 : i32
    scf.if %2 {
      %cst_23 = arith.constant 0.000000e+00 : f32
      %39 = vector.broadcast %cst_23 : f32 to vector<4x1xf32>
      %c0_24 = arith.constant 0 : index
      %c0_25 = arith.constant 0 : index
      %40 = vector.load %arg8[%c0_24, %c0_25] : memref<4x1xf32, #tpu.memory_space<vmem>>, vector<4x1xf32>
      tpu.vector_store %arg8[%c0_24, %c0_25], %39 {strides = array<i32>} : memref<4x1xf32, #tpu.memory_space<vmem>>, vector<4x1xf32>,
      %cst_26 = arith.constant 0.000000e+00 : f32
      %41 = vector.broadcast %cst_26 : f32 to vector<1x1xf32>
      %c0_27 = arith.constant 0 : index
      %c0_28 = arith.constant 0 : index
      %42 = vector.load %arg9[%c0_27, %c0_28] : memref<1x1xf32, #tpu.memory_space<vmem>>, vector<1x1xf32>
      tpu.vector_store %arg9[%c0_27, %c0_28], %41 {strides = array<i32>} : memref<1x1xf32, #tpu.memory_space<vmem>>, vector<1x1xf32>,
    } else {
    }
    %c0 = arith.constant 0 : index
    %c0_1 = arith.constant 0 : index
    %c0_2 = arith.constant 0 : index
    %3 = vector.load %arg4[%c0, %c0_1, %c0_2] : memref<1x4x256xf32, #tpu.memory_space<vmem>>, vector<1x4x256xf32>
    %4 = vector.shape_cast %3 : vector<1x4x256xf32> to vector<4x256xf32>
    %c0_3 = arith.constant 0 : index
    %c0_4 = arith.constant 0 : index
    %5 = vector.load %arg5[%c0_3, %c0_4] : memref<8x4xf32, #tpu.memory_space<vmem>>, vector<8x4xf32>
    %cst = arith.constant dense<0.000000e+00> : vector<8x256xf32>
    %6 = tpu.matmul %5, %4, %cst {dimension_numbers = #tpu.dot_dimension_numbers<[1], [0], [0], [1], [0, 0, 1, 1], [], []>} : vector<8x4xf32>, vector<4x256xf32>, vector<8x256xf32> -> vector<8x256xf32>
    %c0_5 = arith.constant 0 : index
    %c0_6 = arith.constant 0 : index
    %7 = vector.load %arg6[%c0_5, %c0_6] : memref<8x1xf32, #tpu.memory_space<vmem>>, vector<8x1xf32>
    %8 = vector.broadcast %7 : vector<8x1xf32> to vector<8x256xf32>
    %9 = arith.addf %6, %8 : vector<8x256xf32>
    %cst_7 = arith.constant dense<0xFF800000> : vector<256xf32>
    %10 = vector.multi_reduction <maximumf>, %9, %cst_7 [0] : vector<8x256xf32> to vector<256xf32>
    %11 = vector.shape_cast %10 : vector<256xf32> to vector<1x256xf32>
    %12 = tpu.iota {dimensions = array<i32: 0>} : vector<8x256xi32>
    %13 = vector.broadcast %11 : vector<1x256xf32> to vector<8x256xf32>
    %14 = arith.cmpf oeq, %9, %13 : vector<8x256xf32>
    %c8_i32 = arith.constant 8 : i32
    %15 = vector.broadcast %c8_i32 : i32 to vector<8x256xi32>
    %16 = arith.select %14, %12, %15 : vector<8x256xi1>, vector<8x256xi32>
    %cst_8 = arith.constant dense<2147483647> : vector<256xi32>
    %17 = vector.multi_reduction <minsi>, %16, %cst_8 [0] : vector<8x256xi32> to vector<256xi32>
    %18 = vector.shape_cast %17 : vector<256xi32> to vector<1x256xi32>
    %c0_9 = arith.constant 0 : index
    %19 = memref.load %arg3[%c0_9] : memref<1xi32, #tpu.memory_space<smem>>
    %20 = vector.broadcast %19 : i32 to vector<1x256xi32>
    %21 = arith.cmpi eq, %18, %20 : vector<1x256xi32>
    %22 = arith.extui %21 : vector<1x256xi1> to vector<1x256xi32>
    %23 = arith.sitofp %22 : vector<1x256xi32> to vector<1x256xf32>
    %c0_10 = arith.constant 0 : index
    %c0_11 = arith.constant 0 : index
    %24 = vector.load %arg8[%c0_10, %c0_11] : memref<4x1xf32, #tpu.memory_space<vmem>>, vector<4x1xf32>
    %25 = vector.broadcast %23 : vector<1x256xf32> to vector<4x256xf32>
    %26 = arith.mulf %4, %25 : vector<4x256xf32>
    %cst_12 = arith.constant 1.000000e+00 : f32
    %27 = vector.broadcast %cst_12 : f32 to vector<256x1xf32>
    %cst_13 = arith.constant dense<0.000000e+00> : vector<4x1xf32>
    %28 = tpu.matmul %26, %27, %cst_13 {dimension_numbers = #tpu.dot_dimension_numbers<[1], [0], [0], [1], [0, 0, 1, 1], [], []>} : vector<4x256xf32>, vector<256x1xf32>, vector<4x1xf32> -> vector<4x1xf32>
    %29 = arith.addf %24, %28 : vector<4x1xf32>
    %c0_14 = arith.constant 0 : index
    %c0_15 = arith.constant 0 : index
    %30 = vector.load %arg8[%c0_14, %c0_15] : memref<4x1xf32, #tpu.memory_space<vmem>>, vector<4x1xf32>
    tpu.vector_store %arg8[%c0_14, %c0_15], %29 {strides = array<i32>} : memref<4x1xf32, #tpu.memory_space<vmem>>, vector<4x1xf32>,
    %c0_16 = arith.constant 0 : index
    %c0_17 = arith.constant 0 : index
    %31 = vector.load %arg9[%c0_16, %c0_17] : memref<1x1xf32, #tpu.memory_space<vmem>>, vector<1x1xf32>
    %cst_18 = arith.constant dense<0.000000e+00> : vector<1xf32>
    %32 = vector.multi_reduction <add>, %23, %cst_18 [1] : vector<1x256xf32> to vector<1xf32>
    %33 = vector.shape_cast %32 : vector<1xf32> to vector<1x1xf32>
    %34 = arith.addf %31, %33 : vector<1x1xf32>
    %c0_19 = arith.constant 0 : index
    %c0_20 = arith.constant 0 : index
    %35 = vector.load %arg9[%c0_19, %c0_20] : memref<1x1xf32, #tpu.memory_space<vmem>>, vector<1x1xf32>
    tpu.vector_store %arg9[%c0_19, %c0_20], %34 {strides = array<i32>} : memref<1x1xf32, #tpu.memory_space<vmem>>, vector<1x1xf32>,
    %c0_i32_21 = arith.constant 0 : i32
    %36 = arith.cmpi eq, %arg2, %c0_i32_21 : i32
    %37 = arith.extui %36 : i1 to i32
    %c0_i32_22 = arith.constant 0 : i32
    %38 = arith.cmpi ne, %37, %c0_i32_22 : i32
    scf.if %38 {
      %c0_23 = arith.constant 0 : index
      %c0_24 = arith.constant 0 : index
      %39 = vector.load %arg5[%c0_23, %c0_24] : memref<8x4xf32, #tpu.memory_space<vmem>>, vector<8x4xf32>
      %c0_25 = arith.constant 0 : index
      %c0_26 = arith.constant 0 : index
      %40 = vector.load %arg8[%c0_25, %c0_26] : memref<4x1xf32, #tpu.memory_space<vmem>>, vector<4x1xf32>
      %cst_27 = arith.constant dense<0.000000e+00> : vector<8x1xf32>
      %41 = tpu.matmul %39, %40, %cst_27 {dimension_numbers = #tpu.dot_dimension_numbers<[1], [0], [0], [1], [0, 0, 1, 1], [], []>} : vector<8x4xf32>, vector<4x1xf32>, vector<8x1xf32> -> vector<8x1xf32>
      %c0_28 = arith.constant 0 : index
      %c0_29 = arith.constant 0 : index
      %42 = vector.load %arg6[%c0_28, %c0_29] : memref<8x1xf32, #tpu.memory_space<vmem>>, vector<8x1xf32>
      %c0_30 = arith.constant 0 : index
      %c0_31 = arith.constant 0 : index
      %43 = vector.load %arg9[%c0_30, %c0_31] : memref<1x1xf32, #tpu.memory_space<vmem>>, vector<1x1xf32>
      %44 = vector.broadcast %43 : vector<1x1xf32> to vector<8x1xf32>
      %45 = arith.mulf %42, %44 : vector<8x1xf32>
      %46 = arith.addf %41, %45 : vector<8x1xf32>
      %c0_32 = arith.constant 0 : index
      %c0_33 = arith.constant 0 : index
      %c0_34 = arith.constant 0 : index
      %c0_35 = arith.constant 0 : index
      %47 = vector.load %arg7[%c0_32, %c0_33, %c0_34, %c0_35] : memref<1x1x8x1xf32, #tpu.memory_space<vmem>>, vector<1x1x8x1xf32>
      %48 = vector.shape_cast %47 : vector<1x1x8x1xf32> to vector<8x1xf32>
      %49 = vector.shape_cast %46 : vector<8x1xf32> to vector<1x1x8x1xf32>
      tpu.vector_store %arg7[%c0_32, %c0_33, %c0_34, %c0_35], %49 {strides = array<i32>} : memref<1x1x8x1xf32, #tpu.memory_space<vmem>>, vector<1x1x8x1xf32>,
    } else {
    }
    return
  }
  func.func @transform_0(%arg0: i32, %arg1: i32, %arg2: i32, %arg3: memref<1xi32, #tpu.memory_space<smem>>) -> (i32, i32, i32) {
    %c1_i32 = arith.constant 1 : i32
    %0 = arith.muli %arg1, %c1_i32 : i32
    %1 = arith.addi %0, %arg2 : i32
    %c0_i32 = arith.constant 0 : i32
    %c0_i32_0 = arith.constant 0 : i32
    return %arg0, %c0_i32, %1 : i32, i32, i32
  }
  func.func @transform_1(%arg0: i32, %arg1: i32, %arg2: i32, %arg3: memref<1xi32, #tpu.memory_space<smem>>) -> (i32, i32) {
    %c0_i32 = arith.constant 0 : i32
    %c0_i32_0 = arith.constant 0 : i32
    %c0_i32_1 = arith.constant 0 : i32
    return %c0_i32, %c0_i32_0 : i32, i32
  }
  func.func @transform_2(%arg0: i32, %arg1: i32, %arg2: i32, %arg3: memref<1xi32, #tpu.memory_space<smem>>) -> (i32, i32) {
    %c0_i32 = arith.constant 0 : i32
    %c0_i32_0 = arith.constant 0 : i32
    %c0_i32_1 = arith.constant 0 : i32
    return %c0_i32, %c0_i32_0 : i32, i32
  }
  func.func @transform_3(%arg0: i32, %arg1: i32, %arg2: i32, %arg3: memref<1xi32, #tpu.memory_space<smem>>) -> (i32, i32, i32, i32) {
    %c0_i32 = arith.constant 0 : i32
    %c0_i32_0 = arith.constant 0 : i32
    %c0_i32_1 = arith.constant 0 : i32
    return %arg0, %arg1, %c0_i32, %c0_i32_0 : i32, i32, i32, i32
  }
}

</mosaic_0001>

<llo_original>
// kernel: tpu_custom_call.1
$region0: #{tpu_custom_call.1}
  #allocation0 [shape = 'u32[]', space=smem, size = 0x4, offset = 0x4, fixed_abs, tag = 'smem constant byte address 0x4 - core index']
  #allocation1 [shape = 'u32[144,128]{1,0:T(1,128)}', space=vmem, size = 0x12000, scoped, tag = 'internal scratch']
  #allocation2 [shape = 'f32[4,1]{1,0:T(4,128)}', space=vmem, size = 0x800, scoped, tag = 'scratch operand']
  #allocation3 [shape = 'f32[1,1]{1,0:T(1,128)}', space=vmem, size = 0x200, scoped, tag = 'scratch operand']
  #allocation4 [shape = 's32[1]{0}', space=sflag, size = 0x4, scoped, tag = 'scoped memory for tpu_custom_call.1']
  #allocation5 [shape = 's32[1]{0:T(128)S(6)}', space=smem, size = 0x200, scoped, tag = 'prefetched SMEM operand 0']
  %s0 = inlined_call_operand.<no memory space> [shape: s32[1], index: 0, kind: input, shape index: {}]
  %s1 = inlined_call_operand.vmem [shape: f32[2,4,256], index: 1, kind: input, shape index: {}]
  %s2 = inlined_call_operand.vmem [shape: f32[8,4], index: 2, kind: input, shape index: {}]
  %s3 = inlined_call_operand.vmem [shape: f32[8,1], index: 3, kind: input, shape index: {}]
  %s4 = inlined_call_operand.vmem [shape: f32[2,1,8,1], index: 4, kind: output, shape index: {}]
  %s5 = sld [smem:[#allocation0]]
  $region53: #{tpu_custom_call.1} parent=0
    _
  %s7 = ssub.s32 1, %s5
  %s8 = scalar_select 0, %s7, %s5
  %9 = sst [smem:[#allocation5]] %s0
  loop: start=0, step=1, limit=4
  $region2: #{tpu_custom_call.1} parent=0 // loop_pre_header
    _
  $region3: #{tpu_custom_call.1} parent=0 // loop_header
    %s11 = sphi 0, %s15
    %p12 = scmp.ge.s32.totalorder %s11, 4
    %s18 = sphi 0, %s37
    %s19 = sphi 0, %s33
    %s20 = sphi 0, %s29
    %s21 = sphi 0, %s18
    %s22 = sphi 0, %s19
    %s23 = sphi 0, %s20
    %s24 = sphi 0, %s21
    %s25 = sphi 0, %s22
    %s26 = sphi 0, %s23
    %s44 = sphi 0, %s46
    %s47 = sphi 0, %s44
    %s48 = sphi 0, %s47
    %s64 = sphi 0, %s48
    %s68 = sphi 0, %s68
    %s70 = sphi 0, %s68
    %s71 = sphi 0, %s70
    %s85 = sphi 0, %s71
    %s89 = sphi 0, %s89
    %s91 = sphi 0, %s89
    %s92 = sphi 0, %s91
    %s106 = sphi 0, %s92
    %s114 = sphi 0, %s116
    %s117 = sphi 0, %s114
    %s118 = sphi 0, %s117
    %s134 = sphi 0, %s118
  $region4: #{tpu_custom_call.1} parent=0 // loop_header_branch
    %14 = sbr.rel (%p12) target = $region8
  $region5: #{tpu_custom_call.1} parent=0 // loop_body
    %s16 = ssub.s32 %s11, 1
    %s17 = ssub.s32 %s11, 2
    %s27 = sadd.s32 1, %s20
    %p28 = scmp.ge.s32.totalorder %s27, 1
    %s29 = scalar_select %p28, 0, %s27
    %s30 = sadd.s32 1, %s19
    %s31 = scalar_select %p28, %s30, %s19
    %p32 = scmp.ge.s32.totalorder %s31, 1
    %s33 = scalar_select %p32, 0, %s31
    %s34 = sadd.s32 1, %s18
    %s35 = scalar_select %p32, %s34, %s18
    %p36 = scmp.ge.s32.totalorder %s35, 2
    %s37 = scalar_select %p36, 0, %s35
    %s38 = sadd.s32 %s19, %s20
    %s39 = sadd.s32 %s33, %s29
    %s40 = ssub.s32 %s18, %s37
    %s41 = ssub.s32 %s38, %s39
    %s42 = sor.u32 %s40, %s41
    %p43 = scmp.eq.s32.totalorder %s42, 0
    %s45 = sadd.s32 %s44, 1
    %s46 = scalar_select %p43, %s44, %s45
    %p49 = pneg %p43
    %p50 = scmp.eq.s32.totalorder %s11, 1
    %p51 = por %p49, %p50
    %p52 = scmp.ne.s32.totalorder %s44, %s47
    %p53 = scmp.eq.s32.totalorder %s11, 0
    %p54 = por %p52, %p53
    %p55 = scmp.ne.s32.totalorder %s44, %s47
    %p56 = scmp.eq.s32.totalorder %s16, 1
    %p57 = por %p55, %p56
    %p58 = scmp.ne.s32.totalorder %s47, %s48
    %p59 = scmp.eq.s32.totalorder %s16, 0
    %p60 = por %p58, %p59
    %p61 = scmp.ne.s32.totalorder %s47, %s48
    %p62 = scmp.eq.s32.totalorder %s17, 1
    %p63 = por %p61, %p62
    %p65 = scmp.ne.s32.totalorder %s48, %s64
    %p66 = scmp.eq.s32.totalorder %s17, 0
    %p67 = por %p65, %p66
    %s69 = sadd.s32 %s68, 1
    %p72 = scmp.eq.s32.totalorder %s11, 1
    %p73 = scmp.ne.s32.totalorder %s68, %s70
    %p74 = scmp.eq.s32.totalorder %s11, 0
    %p75 = por %p73, %p74
    %p76 = scmp.ne.s32.totalorder %s68, %s70
    %p77 = scmp.eq.s32.totalorder %s16, 1
    %p78 = por %p76, %p77
    %p79 = scmp.ne.s32.totalorder %s70, %s71
    %p80 = scmp.eq.s32.totalorder %s16, 0
    %p81 = por %p79, %p80
    %p82 = scmp.ne.s32.totalorder %s70, %s71
    %p83 = scmp.eq.s32.totalorder %s17, 1
    %p84 = por %p82, %p83
    %p86 = scmp.ne.s32.totalorder %s71, %s85
    %p87 = scmp.eq.s32.totalorder %s17, 0
    %p88 = por %p86, %p87
    %s90 = sadd.s32 %s89, 1
    %p93 = scmp.eq.s32.totalorder %s11, 1
    %p94 = scmp.ne.s32.totalorder %s89, %s91
    %p95 = scmp.eq.s32.totalorder %s11, 0
    %p96 = por %p94, %p95
    %p97 = scmp.ne.s32.totalorder %s89, %s91
    %p98 = scmp.eq.s32.totalorder %s16, 1
    %p99 = por %p97, %p98
    %p100 = scmp.ne.s32.totalorder %s91, %s92
    %p101 = scmp.eq.s32.totalorder %s16, 0
    %p102 = por %p100, %p101
    %p103 = scmp.ne.s32.totalorder %s91, %s92
    %p104 = scmp.eq.s32.totalorder %s17, 1
    %p105 = por %p103, %p104
    %p107 = scmp.ne.s32.totalorder %s92, %s106
    %p108 = scmp.eq.s32.totalorder %s17, 0
    %p109 = por %p107, %p108
    %s110 = ssub.s32 %s18, %s37
    %s111 = ssub.s32 %s19, %s33
    %s112 = sor.u32 %s110, %s111
    %p113 = scmp.eq.s32.totalorder %s112, 0
    %s115 = sadd.s32 %s114, 1
    %s116 = scalar_select %p113, %s114, %s115
    %p119 = pneg %p113
    %p120 = scmp.eq.s32.totalorder %s11, 1
    %p121 = por %p119, %p120
    %p122 = scmp.ne.s32.totalorder %s114, %s117
    %p123 = scmp.eq.s32.totalorder %s11, 0
    %p124 = por %p122, %p123
    %p125 = scmp.ne.s32.totalorder %s114, %s117
    %p126 = scmp.eq.s32.totalorder %s16, 1
    %p127 = por %p125, %p126
    %p128 = scmp.ne.s32.totalorder %s117, %s118
    %p129 = scmp.eq.s32.totalorder %s16, 0
    %p130 = por %p128, %p129
    %p131 = scmp.ne.s32.totalorder %s117, %s118
    %p132 = scmp.eq.s32.totalorder %s17, 1
    %p133 = por %p131, %p132
    %p135 = scmp.ne.s32.totalorder %s118, %s134
    %p136 = scmp.eq.s32.totalorder %s17, 0
    %p137 = por %p135, %p136
    %p138 = scmp.le.s32.totalorder 1, %s11
    %p139 = scmp.lt.s32.totalorder %s11, 3
    %p140 = pnand %p138, %p139
    %p141 = pneg %p140
    // Predicated region
    $region9: #{tpu_custom_call.1} parent=5 // pred_check
      _
    $region10: #{tpu_custom_call.1} parent=5 // pred_check_branch
      %143 = sbr.rel (%p140) target = $region12
    $region11: #{tpu_custom_call.1} parent=5 // pred_region
      %s144 = ssub.s32 %s11, 1
      // Predicated region
      $region13: #{tpu_custom_call.1} parent=11 // pred_check
        %p145 = pneg %p81
      $region14: #{tpu_custom_call.1} parent=11 // pred_check_branch
        %147 = sbr.rel (%p145) target = $region16
      $region15: #{tpu_custom_call.1} parent=11 // pred_region
        _
      $region16: #{tpu_custom_call.1} parent=11 // pred_fallthru
        _
      // Predicated region
      $region17: #{tpu_custom_call.1} parent=11 // pred_check
        %p148 = pneg %p102
      $region18: #{tpu_custom_call.1} parent=11 // pred_check_branch
        %150 = sbr.rel (%p148) target = $region20
      $region19: #{tpu_custom_call.1} parent=11 // pred_region
        _
      $region20: #{tpu_custom_call.1} parent=11 // pred_fallthru
        _
    $region12: #{tpu_custom_call.1} parent=5 // pred_fallthru
      _
    %p151 = scmp.lt.s32.totalorder %s11, 2
    // Predicated region
    $region21: #{tpu_custom_call.1} parent=5 // pred_check
      %p152 = pneg %p151
    $region22: #{tpu_custom_call.1} parent=5 // pred_check_branch
      %154 = sbr.rel (%p152) target = $region24
    $region23: #{tpu_custom_call.1} parent=5 // pred_region
      // Predicated region
      $region25: #{tpu_custom_call.1} parent=23 // pred_check
        %p155 = pneg %p54
      $region26: #{tpu_custom_call.1} parent=23 // pred_check_branch
        %157 = sbr.rel (%p155) target = $region28
      $region27: #{tpu_custom_call.1} parent=23 // pred_region
        %s158 = sadd.s32 %s19, %s20
        %s159 = smul.u32 2, %s158
        %p160 = scmp.lt.s32.totalorder %s18, 1
        %s161 = scalar_select %p160, %s18, 1
        %p162 = scmp.lt.s32.totalorder %s159, 1
        %s163 = scalar_select %p162, %s159, 1
        %s164 = smul.addr %s161, 2
        %s165 = sadd.s32 %s163, %s164
        %s166 = smul.addr %s165, 4
        %s167 = scalar_lea.vmem %s1, %s166
        %s168 = sadd.s32 %s19, %s20
        %s169 = smul.u32 2, %s168
      $region28: #{tpu_custom_call.1} parent=23 // pred_fallthru
        _
    $region24: #{tpu_custom_call.1} parent=5 // pred_fallthru
      _
    %p170 = scmp.le.s32.totalorder 1, %s11
    %p171 = scmp.lt.s32.totalorder %s11, 3
    %p172 = pnand %p170, %p171
    %p173 = pneg %p172
    // Predicated region
    $region29: #{tpu_custom_call.1} parent=5 // pred_check
      _
    $region30: #{tpu_custom_call.1} parent=5 // pred_check_branch
      %175 = sbr.rel (%p172) target = $region32
    $region31: #{tpu_custom_call.1} parent=5 // pred_region
      %s176 = ssub.s32 %s11, 1
      %s177 = sadd.s32 %s22, %s23
      %s178 = smul.u32 2, %s177
      %p179 = scmp.lt.s32.totalorder %s21, 1
      %s180 = scalar_select %p179, %s21, 1
      %p181 = scmp.lt.s32.totalorder %s178, 1
      %s182 = scalar_select %p181, %s178, 1
      %s183 = smul.addr %s180, 2
      %s184 = sadd.s32 %s182, %s183
      %s185 = smul.addr %s184, 4
      %s186 = scalar_lea.vmem %s1, %s185
      %p187 = pneg %p60
      %p188 = pneg %p57
      %p189 = pneg %p81
      %p190 = pneg %p78
      %p191 = pneg %p102
      %p192 = pneg %p99
      %p193 = pneg %p130
      %p194 = pneg %p127
      %p195 = scmp.lt.s32.totalorder %s21, 1
      %s196 = scalar_select %p195, %s21, 1
      %p197 = scmp.lt.s32.totalorder %s22, 0
      %s198 = scalar_select %p197, %s22, 0
      %s199 = sadd.s32 %s198, %s196
      %s200 = smul.addr %s199, 8
      %s201 = scalar_lea.vmem %s4, %s200
      %s202 = sadd.s32 %s22, %s23
      %s203 = smul.u32 2, %s202
      %p204 = scmp.lt.s32.totalorder %s21, 1
      %s205 = scalar_select %p204, %s21, 1
      %p206 = scmp.lt.s32.totalorder %s203, 1
      %s207 = scalar_select %p206, %s203, 1
      %s208 = smul.addr %s205, 2
      %s209 = sadd.s32 %s207, %s208
      %s210 = smul.addr %s209, 4
      %s211 = scalar_lea.vmem %s1, %s210
      %s212 = sadd.s32 %s22, %s23
      %s213 = smul.u32 2, %s212
      %p214 = scmp.lt.s32.totalorder %s21, 1
      %s215 = scalar_select %p214, %s21, 1
      %p216 = scmp.lt.s32.totalorder %s22, 0
      %s217 = scalar_select %p216, %s22, 0
      %s218 = sadd.s32 %s217, %s215
      %s219 = smul.addr %s218, 8
      %s220 = scalar_lea.vmem %s4, %s219
      %p221 = scmp.eq.s32.totalorder %s23, 0
      // Predicated region
      $region33: #{tpu_custom_call.1} parent=31 // pred_check
        %p222 = pneg %p221
      $region34: #{tpu_custom_call.1} parent=31 // pred_check_branch
        %224 = sbr.rel (%p222) target = $region36
      $region35: #{tpu_custom_call.1} parent=31 // pred_region
        %vm225 = vcmask 3072
        %226 = vst.msk [vmem:[#allocation2] sm:$0xf] %vm225, 0.0
        %vm227 = vcmask 0
        %228 = vst.msk [vmem:[#allocation3] sm:$0x1] %vm227, 0.0
      $region36: #{tpu_custom_call.1} parent=31 // pred_fallthru
        _
      %v229 = vld [vmem:[%s211] sm:$0xff]
      %v230 = vld [vmem:[%s2] sm:$0xff]
      %v231 = vld [vmem:[%s3] sm:$0xff]
      %233 = vset.pattern.permute.xlu0 0
      %234 = vperm.xlu0 %233, %v231
      %v235 = vpop.permute.xlu0 %234
      %v238 = vcombine.high %v229, %v229
      %vm239 = vcmask 31744
      %v241 = vsel %vm239, %v230, 0
      %vm243 = vcmask 1043456
      %v244 = vsel %vm243, %v229, 0
      %v246 = vsel %vm243, %v238, 0
      %248 = vmatprep.subr.mxu0 %v246
      %249 = vmatpush1.msra.mxu0 %v244
      %250 = vmatprep.subr.mxu0 0.0
      %251 = vmatpush1.msra.mxu0 0.0
      %252 = vmatprep.subr.mxu0 0.0
      %253 = vmatpush1.msra.mxu0 0.0
      %254 = vmatprep.subr.mxu0 0.0
      %255 = vmatpush1.msra.mxu0 0.0
      %256 = vmatprep.subr.mxu0 0.0
      %257 = vmatpush1.msra.mxu0 0.0
      %258 = vmatprep.subr.mxu0 0.0
      %259 = vmatpush1.msra.mxu0 0.0
      %260 = vmatprep.subr.mxu0 0.0
      %261 = vmatpush1.msra.mxu0 0.0
      %262 = vmatprep.subr.mxu0 0.0
      %263 = vmatpush1.msra.mxu0 0.0
      %264 = vmatprep.subr.mxu0 0.0
      %265 = vmatpush1.msra.mxu0 0.0
      %266 = vmatprep.subr.mxu0 0.0
      %267 = vmatpush1.msra.mxu0 0.0
      %268 = vmatprep.subr.mxu0 0.0
      %269 = vmatpush1.msra.mxu0 0.0
      %270 = vmatprep.subr.mxu0 0.0
      %271 = vmatpush1.msra.mxu0 0.0
      %272 = vmatprep.subr.mxu0 0.0
      %273 = vmatpush1.msra.mxu0 0.0
      %274 = vmatprep.subr.mxu0 0.0
      %275 = vmatpush1.msra.mxu0 0.0
      %276 = vmatprep.subr.mxu0 0.0
      %277 = vmatpush1.msra.mxu0 0.0
      %278 = vmatprep.subr.mxu0 0.0
      %279 = vmatpush1.msra.mxu0 0.0
      %280 = vmatprep.subr.mxu0 0.0
      %281 = vmatpush1.msra.mxu0 0.0
      %282 = vmatprep.subr.mxu0 0.0
      %283 = vmatpush1.msra.mxu0 0.0
      %284 = vmatprep.subr.mxu0 0.0
      %285 = vmatpush1.msra.mxu0 0.0
      %286 = vmatprep.subr.mxu0 0.0
      %287 = vmatpush1.msra.mxu0 0.0
      %288 = vmatprep.subr.mxu0 0.0
      %289 = vmatpush1.msra.mxu0 0.0
      %290 = vmatprep.subr.mxu0 0.0
      %291 = vmatpush1.msra.mxu0 0.0
      %292 = vmatprep.subr.mxu0 0.0
      %293 = vmatpush1.msra.mxu0 0.0
      %294 = vmatprep.subr.mxu0 0.0
      %295 = vmatpush1.msra.mxu0 0.0
      %296 = vmatprep.subr.mxu0 0.0
      %297 = vmatpush1.msra.mxu0 0.0
      %298 = vmatprep.subr.mxu0 0.0
      %299 = vmatpush1.msra.mxu0 0.0
      %300 = vmatprep.subr.mxu0 0.0
      %301 = vmatpush1.msra.mxu0 0.0
      %302 = vmatprep.subr.mxu0 0.0
      %303 = vmatpush1.msra.mxu0 0.0
      %304 = vmatprep.subr.mxu0 0.0
      %305 = vmatpush1.msra.mxu0 0.0
      %306 = vmatprep.subr.mxu0 0.0
      %307 = vmatpush1.msra.mxu0 0.0
      %308 = vmatprep.subr.mxu0 0.0
      %309 = vmatpush1.msra.mxu0 0.0
      %310 = vmatprep.subr.mxu0 0.0
      %311 = vmatpush1.msra.mxu0 0.0
      %312 = vmatprep.mubr.f32.mxu0 0.0
      %313 = vmatmul.mubr.f32.gmra.mrb[0].mxu0 %v241
      %v314 = vpop.f32.mrb[0].mxu0
      %v315 = vadd.f32 %v235, %v314
      %v316 = vpop.f32.mrb[0].mxu0
      %v317 = vadd.f32 %v235, %v316
      %318 = vdwg.mxu0
      %v319 = vrot.slane %v315, 4
      %v320 = vmax.f32 %v315, %v319
      %v321 = vrot.slane %v320, 2
      %v322 = vmax.f32 %v320, %v321
      %v323 = vrot.slane %v322, 1
      %v324 = vmax.f32 %v322, %v323
      %v325 = vrot.slane %v317, 4
      %v326 = vmax.f32 %v317, %v325
      %v327 = vrot.slane %v326, 2
      %v328 = vmax.f32 %v326, %v327
      %v329 = vrot.slane %v328, 1
      %v330 = vmax.f32 %v328, %v329
      %v331 = vlaneseq
      %v332 = vshrl.u32 %v331, 7
      %vm333 = vcmp.eq.f32.partialorder %v315, %v324
      %vm334 = vcmp.eq.f32.partialorder %v317, %v330
      %v335 = vsel %vm333, %v332, 8
      %v336 = vsel %vm334, %v332, 8
      %v337 = vrot.slane %v335, 4
      %vm338 = vcmp.lt.s32.totalorder %v335, %v337
      %v339 = vsel %vm338, %v335, %v337
      %v340 = vrot.slane %v339, 2
      %vm341 = vcmp.lt.s32.totalorder %v339, %v340
      %v342 = vsel %vm341, %v339, %v340
      %v343 = vrot.slane %v342, 1
      %vm344 = vcmp.lt.s32.totalorder %v342, %v343
      %v345 = vsel %vm344, %v342, %v343
      %v346 = vrot.slane %v336, 4
      %vm347 = vcmp.lt.s32.totalorder %v336, %v346
      %v348 = vsel %vm347, %v336, %v346
      %v349 = vrot.slane %v348, 2
      %vm350 = vcmp.lt.s32.totalorder %v348, %v349
      %v351 = vsel %vm350, %v348, %v349
      %v352 = vrot.slane %v351, 1
      %vm353 = vcmp.lt.s32.totalorder %v351, %v352
      %v354 = vsel %vm353, %v351, %v352
      %s355 = sld [smem:[#allocation5]]
      %v356 = vstv %s355
      %vm357 = vcmp.eq.s32.totalorder %v345, %v356
      %vm358 = vcmp.eq.s32.totalorder %v354, %v356
      %v359 = vsel %vm357, 1, 0
      %v360 = vsel %vm358, 1, 0
      %v361 = vcvt.s32.f32 %v359
      %v362 = vcvt.s32.f32 %v360
      %v363 = vld [vmem:[#allocation2] sm:$0xf]
      %v366 = vcombine.low %v361, %v362
      %v368 = vmul.f32 %v229, %v366
      %v370 = vcombine.high %v368, %v368
      %372 = vmatprep.subr.mxu0 0.0
      %373 = vmatpush1.msra.mxu0 1.0
      %374 = vmatprep.subr.mxu0 0.0
      %375 = vmatpush1.msra.mxu0 1.0
      %376 = vmatprep.subr.mxu0 0.0
      %377 = vmatpush1.msra.mxu0 1.0
      %378 = vmatprep.subr.mxu0 0.0
      %379 = vmatpush1.msra.mxu0 1.0
      %380 = vmatprep.subr.mxu0 0.0
      %381 = vmatpush1.msra.mxu0 1.0
      %382 = vmatprep.subr.mxu0 0.0
      %383 = vmatpush1.msra.mxu0 1.0
      %384 = vmatprep.subr.mxu0 0.0
      %385 = vmatpush1.msra.mxu0 1.0
      %386 = vmatprep.subr.mxu0 0.0
      %387 = vmatpush1.msra.mxu0 1.0
      %388 = vmatprep.subr.mxu0 0.0
      %389 = vmatpush1.msra.mxu0 1.0
      %390 = vmatprep.subr.mxu0 0.0
      %391 = vmatpush1.msra.mxu0 1.0
      %392 = vmatprep.subr.mxu0 0.0
      %393 = vmatpush1.msra.mxu0 1.0
      %394 = vmatprep.subr.mxu0 0.0
      %395 = vmatpush1.msra.mxu0 1.0
      %396 = vmatprep.subr.mxu0 0.0
      %397 = vmatpush1.msra.mxu0 1.0
      %398 = vmatprep.subr.mxu0 0.0
      %399 = vmatpush1.msra.mxu0 1.0
      %400 = vmatprep.subr.mxu0 0.0
      %401 = vmatpush1.msra.mxu0 1.0
      %402 = vmatprep.subr.mxu0 0.0
      %403 = vmatpush1.msra.mxu0 1.0
      %404 = vmatprep.subr.mxu0 0.0
      %405 = vmatpush1.msra.mxu0 1.0
      %406 = vmatprep.subr.mxu0 0.0
      %407 = vmatpush1.msra.mxu0 1.0
      %408 = vmatprep.subr.mxu0 0.0
      %409 = vmatpush1.msra.mxu0 1.0
      %410 = vmatprep.subr.mxu0 0.0
      %411 = vmatpush1.msra.mxu0 1.0
      %412 = vmatprep.subr.mxu0 0.0
      %413 = vmatpush1.msra.mxu0 1.0
      %414 = vmatprep.subr.mxu0 0.0
      %415 = vmatpush1.msra.mxu0 1.0
      %416 = vmatprep.subr.mxu0 0.0
      %417 = vmatpush1.msra.mxu0 1.0
      %418 = vmatprep.subr.mxu0 0.0
      %419 = vmatpush1.msra.mxu0 1.0
      %420 = vmatprep.subr.mxu0 0.0
      %421 = vmatpush1.msra.mxu0 1.0
      %422 = vmatprep.subr.mxu0 0.0
      %423 = vmatpush1.msra.mxu0 1.0
      %424 = vmatprep.subr.mxu0 0.0
      %425 = vmatpush1.msra.mxu0 1.0
      %426 = vmatprep.subr.mxu0 0.0
      %427 = vmatpush1.msra.mxu0 1.0
      %428 = vmatprep.subr.mxu0 0.0
      %429 = vmatpush1.msra.mxu0 1.0
      %430 = vmatprep.subr.mxu0 0.0
      %431 = vmatpush1.msra.mxu0 1.0
      %432 = vmatprep.subr.mxu0 0.0
      %433 = vmatpush1.msra.mxu0 1.0
      %434 = vmatprep.subr.mxu0 0.0
      %435 = vmatpush1.msra.mxu0 1.0
      %436 = vmatprep.mubr.f32.mxu0 %v370
      %437 = vmatmul.mubr.f32.gmra.mrb[0].mxu0 %v368
      %v438 = vpop.f32.mrb[0].mxu0
      %v439 = vadd.f32 0.0, %v438
      %v440 = vpop.f32.mrb[0].mxu0
      %441 = vdwg.mxu0
      %v442 = vadd.f32 %v363, %v439
      %vm443 = vcmask 3072
      %444 = vst.msk [vmem:[#allocation2] sm:$0xf] %vm443, %v442
      %v445 = vld [vmem:[#allocation3] sm:$0x1]
      %v446 = vadd.f32 %v361, %v362
      %447 = vadd.xlane.f32.xlu0 %v446
      %v448 = vpop.xlane.xlu0 %447
      %v449 = vadd.f32 %v445, %v448
      %vm450 = vcmask 0
      %451 = vst.msk [vmem:[#allocation3] sm:$0x1] %vm450, %v449
      // Predicated region
      $region37: #{tpu_custom_call.1} parent=31 // pred_check
        %p452 = pneg %p221
      $region38: #{tpu_custom_call.1} parent=31 // pred_check_branch
        %454 = sbr.rel (%p452) target = $region40
      $region39: #{tpu_custom_call.1} parent=31 // pred_region
        %v455 = vld [vmem:[%s2] sm:$0xff]
        %v456 = vld [vmem:[#allocation2] sm:$0xf]
        %v457 = vld [vmem:[%s3] sm:$0xff]
        %v458 = vld [vmem:[#allocation3] sm:$0x1]
        %v460 = vlaneseq
        %v461 = vshrl.u32 %v460, 7
        %v462 = vsub.s32 0, %v461
        %v463 = vrot.slane %v458, %v462
        %v465 = vmul.f32 %v457, %v463
        %v467 = vsel %vm239, %v455, 0
        %v470 = vsel %vm243, %v456, 0
        %472 = vmatprep.subr.mxu0 0.0
        %473 = vmatpush1.msra.mxu0 %v470
        %474 = vmatprep.subr.mxu0 0.0
        %475 = vmatpush1.msra.mxu0 0.0
        %476 = vmatprep.subr.mxu0 0.0
        %477 = vmatpush1.msra.mxu0 0.0
        %478 = vmatprep.subr.mxu0 0.0
        %479 = vmatpush1.msra.mxu0 0.0
        %480 = vmatprep.subr.mxu0 0.0
        %481 = vmatpush1.msra.mxu0 0.0
        %482 = vmatprep.subr.mxu0 0.0
        %483 = vmatpush1.msra.mxu0 0.0
        %484 = vmatprep.subr.mxu0 0.0
        %485 = vmatpush1.msra.mxu0 0.0
        %486 = vmatprep.subr.mxu0 0.0
        %487 = vmatpush1.msra.mxu0 0.0
        %488 = vmatprep.subr.mxu0 0.0
        %489 = vmatpush1.msra.mxu0 0.0
        %490 = vmatprep.subr.mxu0 0.0
        %491 = vmatpush1.msra.mxu0 0.0
        %492 = vmatprep.subr.mxu0 0.0
        %493 = vmatpush1.msra.mxu0 0.0
        %494 = vmatprep.subr.mxu0 0.0
        %495 = vmatpush1.msra.mxu0 0.0
        %496 = vmatprep.subr.mxu0 0.0
        %497 = vmatpush1.msra.mxu0 0.0
        %498 = vmatprep.subr.mxu0 0.0
        %499 = vmatpush1.msra.mxu0 0.0
        %500 = vmatprep.subr.mxu0 0.0
        %501 = vmatpush1.msra.mxu0 0.0
        %502 = vmatprep.subr.mxu0 0.0
        %503 = vmatpush1.msra.mxu0 0.0
        %504 = vmatprep.subr.mxu0 0.0
        %505 = vmatpush1.msra.mxu0 0.0
        %506 = vmatprep.subr.mxu0 0.0
        %507 = vmatpush1.msra.mxu0 0.0
        %508 = vmatprep.subr.mxu0 0.0
        %509 = vmatpush1.msra.mxu0 0.0
        %510 = vmatprep.subr.mxu0 0.0
        %511 = vmatpush1.msra.mxu0 0.0
        %512 = vmatprep.subr.mxu0 0.0
        %513 = vmatpush1.msra.mxu0 0.0
        %514 = vmatprep.subr.mxu0 0.0
        %515 = vmatpush1.msra.mxu0 0.0
        %516 = vmatprep.subr.mxu0 0.0
        %517 = vmatpush1.msra.mxu0 0.0
        %518 = vmatprep.subr.mxu0 0.0
        %519 = vmatpush1.msra.mxu0 0.0
        %520 = vmatprep.subr.mxu0 0.0
        %521 = vmatpush1.msra.mxu0 0.0
        %522 = vmatprep.subr.mxu0 0.0
        %523 = vmatpush1.msra.mxu0 0.0
        %524 = vmatprep.subr.mxu0 0.0
        %525 = vmatpush1.msra.mxu0 0.0
        %526 = vmatprep.subr.mxu0 0.0
        %527 = vmatpush1.msra.mxu0 0.0
        %528 = vmatprep.subr.mxu0 0.0
        %529 = vmatpush1.msra.mxu0 0.0
        %530 = vmatprep.subr.mxu0 0.0
        %531 = vmatpush1.msra.mxu0 0.0
        %532 = vmatprep.subr.mxu0 0.0
        %533 = vmatpush1.msra.mxu0 0.0
        %534 = vmatprep.subr.mxu0 0.0
        %535 = vmatpush1.msra.mxu0 0.0
        %536 = vmatprep.mubr.f32.mxu0 0.0
        %537 = vmatmul.mubr.f32.gmra.mrb[0].mxu0 %v467
        %v538 = vpop.f32.mrb[0].mxu0
        %v539 = vadd.f32 %v465, %v538
        %v540 = vpop.f32.mrb[0].mxu0
        %541 = vdwg.mxu0
        %vm542 = vcmask 7168
        %543 = vst.msk [vmem:[%s220] sm:$0xff] %vm542, %v539
      $region40: #{tpu_custom_call.1} parent=31 // pred_fallthru
        _
      %p544 = scmp.lt.s32.totalorder %s21, 1
      %s545 = scalar_select %p544, %s21, 1
      %p546 = scmp.lt.s32.totalorder %s22, 0
      %s547 = scalar_select %p546, %s22, 0
      %s548 = sadd.s32 %s547, %s545
      %s549 = smul.addr %s548, 8
      %s550 = scalar_lea.vmem %s4, %s549
      // Predicated region
      $region41: #{tpu_custom_call.1} parent=31 // pred_check
        %p551 = pneg %p127
      $region42: #{tpu_custom_call.1} parent=31 // pred_check_branch
        %553 = sbr.rel (%p551) target = $region44
      $region43: #{tpu_custom_call.1} parent=31 // pred_region
        _
      $region44: #{tpu_custom_call.1} parent=31 // pred_fallthru
        _
    $region32: #{tpu_custom_call.1} parent=5 // pred_fallthru
      _
    %p554 = scmp.le.s32.totalorder 2, %s11
    // Predicated region
    $region45: #{tpu_custom_call.1} parent=5 // pred_check
      %p555 = pneg %p554
    $region46: #{tpu_custom_call.1} parent=5 // pred_check_branch
      %557 = sbr.rel (%p555) target = $region48
    $region47: #{tpu_custom_call.1} parent=5 // pred_region
      %s558 = ssub.s32 %s11, 2
      // Predicated region
      $region49: #{tpu_custom_call.1} parent=47 // pred_check
        %p559 = pneg %p133
      $region50: #{tpu_custom_call.1} parent=47 // pred_check_branch
        %561 = sbr.rel (%p559) target = $region52
      $region51: #{tpu_custom_call.1} parent=47 // pred_region
        %p562 = scmp.lt.s32.totalorder %s24, 1
        %s563 = scalar_select %p562, %s24, 1
        %p564 = scmp.lt.s32.totalorder %s25, 0
        %s565 = scalar_select %p564, %s25, 0
        %s566 = sadd.s32 %s565, %s563
        %s567 = smul.addr %s566, 8
        %s568 = scalar_lea.vmem %s4, %s567
      $region52: #{tpu_custom_call.1} parent=47 // pred_fallthru
        _
    $region48: #{tpu_custom_call.1} parent=5 // pred_fallthru
      _
  $region6: #{tpu_custom_call.1} parent=0 // loop_footer
    %s15 = sadd.s32 1, %s11
  $region7: #{tpu_custom_call.1} parent=0 // loop_footer_branch
    %10 = sbr.rel target = $region3
  $region8: #{tpu_custom_call.1} parent=0 // loop_exit
    _

</llo_original>
